<compile_context>
chip_gen: v6e
topology: v6e:2x2x1
jax: 0.10.0
libtpu: 0.0.40
codegen_flags: <defaults>
</compile_context>

<pallas_src>
import functools

import jax
import jax.numpy as jnp
from jax import lax
from jax.experimental import pallas as pl
from jax.experimental.pallas import tpu as pltpu


# ---------------------------------------------------------------------------
# In-kernel helpers
# ---------------------------------------------------------------------------
def _conv3_same(v, w_m1, w_0, w_p1, is_first_col, is_last_col):
    """'Same' 1-D conv (kernel=3, padding=1, stride=1) as 3 shifted MXU matmuls.

    v            : [C_in, L]  activations (matmul dtype, L on lanes)
    w_*          : [C_out, C_in] weight taps for x[l-1], x[l], x[l+1]
    is_*_col     : [C_in, L] boolean lane masks (column 0 / column L-1)
    returns      : [C_out, L] float32
    """
    L = v.shape[1]
    zero = jnp.zeros((), v.dtype)
    # pltpu.roll uses the XLU slot (co-issues with MXU/VPU); mask the wrapped
    # column to reproduce zero padding.
    v_lm1 = jnp.where(is_first_col, zero, pltpu.roll(v, shift=1, axis=1))
    v_lp1 = jnp.where(is_last_col, zero, pltpu.roll(v, shift=L - 1, axis=1))

    acc = jnp.dot(w_m1, v_lm1, preferred_element_type=jnp.float32)
    acc = acc + jnp.dot(w_0, v, preferred_element_type=jnp.float32)
    acc = acc + jnp.dot(w_p1, v_lp1, preferred_element_type=jnp.float32)
    return acc


def _residual_block1d_kernel(x_ref, w1_ref, b1_ref, w2_ref, b2_ref, o_ref, *,
                             matmul_dtype):
    # x_ref : (B_TILE, C, L)          activations (input dtype, e.g. f32)
    # w*_ref: (3, C_out, C_in)        BN-scale-folded weight taps (matmul dtype)
    # b*_ref: (C_out, 1)              folded BN bias (f32)
    # o_ref : (B_TILE, C, L)
    nb, C, L = x_ref.shape

    # Hoist constants / broadcasts out of the per-sample loop.
    w1_m1, w1_0, w1_p1 = w1_ref[0], w1_ref[1], w1_ref[2]
    w2_m1, w2_0, w2_p1 = w2_ref[0], w2_ref[1], w2_ref[2]
    bias1 = b1_ref[...]
    bias2 = b2_ref[...]
    lane = lax.broadcasted_iota(jnp.int32, (C, L), 1)
    is_first_col = lane == 0
    is_last_col = lane == (L - 1)

    @pl.loop(0, nb)
    def _(b):
        x_f32 = x_ref[b].astype(jnp.float32)                       # [C, L]
        x_mm = x_f32.astype(matmul_dtype)

        # conv1 (+bn1 scale folded into w1) -> +bias -> relu
        h = _conv3_same(x_mm, w1_m1, w1_0, w1_p1, is_first_col, is_last_col)
        h = jnp.maximum(h + bias1, 0.0)

        # conv2 (+bn2 scale folded into w2) -> +bias -> +identity -> relu
        h_mm = h.astype(matmul_dtype)
        y = _conv3_same(h_mm, w2_m1, w2_0, w2_p1, is_first_col, is_last_col)
        y = y + bias2 + x_f32

        o_ref[b] = jnp.maximum(y, 0.0).astype(o_ref.dtype)


# ---------------------------------------------------------------------------
# Wrapper
# ---------------------------------------------------------------------------
def _pick_batch_tile(n, bytes_per_sample, target_bytes=4 * 1024 * 1024):
    """Largest divisor of n whose per-step in+out traffic fits target_bytes,
    keeping >= 2 grid steps when possible (feeds both v7x TensorCores)."""
    best = 1
    for bt in range(1, n + 1):
        if n % bt:
            continue
        if n >= 2 and n // bt < 2:
            continue
        if bt * bytes_per_sample <= target_bytes:
            best = bt
    return best


def residual_block1d_forward(x, w1, bn1, w2, bn2, *, stride=1, eps=1e-5,
                             matmul_dtype=jnp.bfloat16):
    """x: [N, C_in, L]; w1/w2: [C_out, C_in, 3]; bn*: (gamma, beta, mean, var)."""
    if stride != 1:
        # TODO(synk): strided conv1 + Conv1d(k=1, stride)+BN downsample path.
        raise NotImplementedError("ResidualBlock1D Pallas kernel supports stride=1 only")

    N, C_in, L = x.shape
    C_out = w1.shape[0]
    assert C_in == C_out, "stride=1 without downsample requires inplanes == planes"

    # Fold eval-mode BN into the convs: scale goes into the weights (commutes
    # through the matmul), only the bias remains as an elementwise add.
    def fold(w, bn):
        gamma, beta, mean, var = bn
        scale = gamma / jnp.sqrt(var + eps)                      # [C_out]
        bias = beta - mean * scale                               # [C_out]
        w_scaled = w.astype(jnp.float32) * scale[:, None, None]  # [C_out, C_in, 3]
        w_taps = jnp.transpose(w_scaled, (2, 0, 1))              # [3, C_out, C_in]
        return (w_taps.astype(matmul_dtype),
                bias.reshape(-1, 1).astype(jnp.float32))

    w1_t, b1 = fold(w1, bn1)
    w2_t, b2 = fold(w2, bn2)

    itemsize = jnp.dtype(x.dtype).itemsize
    w_itemsize = jnp.dtype(matmul_dtype).itemsize
    bytes_per_sample = 2 * C_in * L * itemsize          # input + output
    b_tile = _pick_batch_tile(N, bytes_per_sample)
    grid = (N // b_tile,)

    # VMEM budget: double-buffered in/out blocks + weights + live temporaries.
    vmem_need = (2 * 2 * b_tile * C_in * L * itemsize
                 + 2 * 2 * 3 * C_out * C_in * w_itemsize
                 + 8 * C_in * L * 4)
    # Cap at 32 MiB so the request is valid on v5e/v6e (128 MiB physical) and
    # v7x (64 MiB physical, 32 MiB scoped default) alike.
    vmem_limit = int(min(32 * 1024 * 1024, max(8 * 1024 * 1024, 2 * vmem_need)))

    flops = int(N * 2 * 2 * 3 * C_in * C_out * L)       # two k=3 convs
    bytes_accessed = int(2 * N * C_in * L * itemsize
                         + 2 * 3 * C_out * C_in * w_itemsize)

    kernel = functools.partial(_residual_block1d_kernel, matmul_dtype=matmul_dtype)

    return pl.pallas_call(
        kernel,
        out_shape=jax.ShapeDtypeStruct((N, C_out, L), x.dtype),
        grid_spec=pltpu.PrefetchScalarGridSpec(
            num_scalar_prefetch=0,
            grid=grid,
            in_specs=[
                pl.BlockSpec((b_tile, C_in, L), lambda n: (n, 0, 0)),   # x tile
                pl.BlockSpec((3, C_out, C_in), lambda n: (0, 0, 0)),    # conv1 taps
                pl.BlockSpec((C_out, 1), lambda n: (0, 0)),             # bn1 bias
                pl.BlockSpec((3, C_out, C_out), lambda n: (0, 0, 0)),   # conv2 taps
                pl.BlockSpec((C_out, 1), lambda n: (0, 0)),             # bn2 bias
            ],
            out_specs=pl.BlockSpec((b_tile, C_out, L), lambda n: (n, 0, 0)),
        ),
        compiler_params=pltpu.CompilerParams(
            dimension_semantics=("parallel",),
            vmem_limit_bytes=vmem_limit,
        ),
        cost_estimate=pl.CostEstimate(
            flops=flops, transcendentals=0, bytes_accessed=bytes_accessed),
    )(x, w1_t, b1, w2_t, b2)


# ---------------------------------------------------------------------------
# Pure-JAX reference (mirrors the PyTorch forward in eval mode, f32)
# ---------------------------------------------------------------------------
def _ref_conv3(x, w):
    L = x.shape[-1]
    xp = jnp.pad(x, ((0, 0), (0, 0), (1, 1)))
    return (jnp.einsum("oi,nil->nol", w[:, :, 0], xp[:, :, 0:L])
            + jnp.einsum("oi,nil->nol", w[:, :, 1], xp[:, :, 1:L + 1])
            + jnp.einsum("oi,nil->nol", w[:, :, 2], xp[:, :, 2:L + 2]))


def _ref_bn(h, gamma, beta, mean, var, eps):
    return ((h - mean[None, :, None]) / jnp.sqrt(var[None, :, None] + eps)
            * gamma[None, :, None] + beta[None, :, None])


def residual_block1d_reference(x, w1, bn1, w2, bn2, eps=1e-5):
    h = jax.nn.relu(_ref_bn(_ref_conv3(x, w1), *bn1, eps))
    y = _ref_bn(_ref_conv3(h, w2), *bn2, eps)
    return jax.nn.relu(y + x)


# ---------------------------------------------------------------------------
# Demo / smoke test
# ---------------------------------------------------------------------------
if __name__ == "__main__":
    N, C, L = 4, 8, 256   # batch=4 -> b_tile=2, grid=(2,) "parallel" steps
    EPS = 1e-5

    key = jax.random.PRNGKey(0)
    keys = jax.random.split(key, 11)

    x = jax.random.normal(keys[0], (N, C, L), dtype=jnp.float32)

    w1 = 0.3 * jax.random.normal(keys[1], (C, C, 3), dtype=jnp.float32)
    w2 = 0.3 * jax.random.normal(keys[2], (C, C, 3), dtype=jnp.float32)

    bn1 = (jax.random.uniform(keys[3], (C,), minval=0.5, maxval=1.5),   # gamma
           0.1 * jax.random.normal(keys[4], (C,)),                      # beta
           0.1 * jax.random.normal(keys[5], (C,)),                      # running_mean
           jax.random.uniform(keys[6], (C,), minval=0.5, maxval=1.5))   # running_var
    bn2 = (jax.random.uniform(keys[7], (C,), minval=0.5, maxval=1.5),
           0.1 * jax.random.normal(keys[8], (C,)),
           0.1 * jax.random.normal(keys[9], (C,)),
           jax.random.uniform(keys[10], (C,), minval=0.5, maxval=1.5))

    ref = jax.block_until_ready(residual_block1d_reference(x, w1, bn1, w2, bn2, eps=EPS))

    # f32 MXU path: must match the reference tightly.
    out_f32 = jax.block_until_ready(
        residual_block1d_forward(x, w1, bn1, w2, bn2, stride=1, eps=EPS,
                                 matmul_dtype=jnp.float32))
    assert out_f32.shape == (N, C, L)
    assert jnp.allclose(out_f32, ref, atol=1e-3, rtol=1e-3), (
        float(jnp.max(jnp.abs(out_f32 - ref))))

    # Default bf16 MXU path: f32 accumulation, slightly looser tolerance.
    out_bf16 = jax.block_until_ready(
        residual_block1d_forward(x, w1, bn1, w2, bn2, stride=1, eps=EPS))
    assert out_bf16.shape == (N, C, L)
    assert jnp.allclose(out_bf16, ref, atol=6e-2, rtol=6e-2), (
        float(jnp.max(jnp.abs(out_bf16 - ref))))

    print("KERNEL_OK")
</pallas_src>

<mosaic_0001>
module attributes {stable_mosaic.version = 11 : i64} {
  func.func @_residual_block1d_kernel(%arg0: i32, %arg1: memref<2x8x256xf32, #tpu.memory_space<vmem>>, %arg2: memref<3x8x8xf32, #tpu.memory_space<vmem>>, %arg3: memref<8x1xf32, #tpu.memory_space<vmem>>, %arg4: memref<3x8x8xf32, #tpu.memory_space<vmem>>, %arg5: memref<8x1xf32, #tpu.memory_space<vmem>>, %arg6: memref<2x8x256xf32, #tpu.memory_space<vmem>>) attributes {dimension_semantics = [#tpu.dimension_semantics<parallel>], iteration_bounds = array<i64: 2>, scalar_prefetch = 0 : i64, scratch_operands = 0 : i64, tpu.core_type = #tpu.core_type<tc>, window_params = [{transform_indices = @transform_0, window_bounds = array<i64: 2, 8, 256>}, {pipeline_mode = #tpu.pipeline_mode<synchronous>, transform_indices = @transform_1, window_bounds = array<i64: 3, 8, 8>}, {pipeline_mode = #tpu.pipeline_mode<synchronous>, transform_indices = @transform_2, window_bounds = array<i64: 8, 1>}, {pipeline_mode = #tpu.pipeline_mode<synchronous>, transform_indices = @transform_3, window_bounds = array<i64: 3, 8, 8>}, {pipeline_mode = #tpu.pipeline_mode<synchronous>, transform_indices = @transform_4, window_bounds = array<i64: 8, 1>}, {transform_indices = @transform_5, window_bounds = array<i64: 2, 8, 256>}]} {
    %c0 = arith.constant 0 : index
    %c0_0 = arith.constant 0 : index
    %c0_1 = arith.constant 0 : index
    %0 = vector.load %arg2[%c0, %c0_0, %c0_1] : memref<3x8x8xf32, #tpu.memory_space<vmem>>, vector<1x8x8xf32>
    %1 = vector.shape_cast %0 : vector<1x8x8xf32> to vector<8x8xf32>
    %c1 = arith.constant 1 : index
    %c0_2 = arith.constant 0 : index
    %c0_3 = arith.constant 0 : index
    %2 = vector.load %arg2[%c1, %c0_2, %c0_3] : memref<3x8x8xf32, #tpu.memory_space<vmem>>, vector<1x8x8xf32>
    %3 = vector.shape_cast %2 : vector<1x8x8xf32> to vector<8x8xf32>
    %c2 = arith.constant 2 : index
    %c0_4 = arith.constant 0 : index
    %c0_5 = arith.constant 0 : index
    %4 = vector.load %arg2[%c2, %c0_4, %c0_5] : memref<3x8x8xf32, #tpu.memory_space<vmem>>, vector<1x8x8xf32>
    %5 = vector.shape_cast %4 : vector<1x8x8xf32> to vector<8x8xf32>
    %c0_6 = arith.constant 0 : index
    %c0_7 = arith.constant 0 : index
    %c0_8 = arith.constant 0 : index
    %6 = vector.load %arg4[%c0_6, %c0_7, %c0_8] : memref<3x8x8xf32, #tpu.memory_space<vmem>>, vector<1x8x8xf32>
    %7 = vector.shape_cast %6 : vector<1x8x8xf32> to vector<8x8xf32>
    %c1_9 = arith.constant 1 : index
    %c0_10 = arith.constant 0 : index
    %c0_11 = arith.constant 0 : index
    %8 = vector.load %arg4[%c1_9, %c0_10, %c0_11] : memref<3x8x8xf32, #tpu.memory_space<vmem>>, vector<1x8x8xf32>
    %9 = vector.shape_cast %8 : vector<1x8x8xf32> to vector<8x8xf32>
    %c2_12 = arith.constant 2 : index
    %c0_13 = arith.constant 0 : index
    %c0_14 = arith.constant 0 : index
    %10 = vector.load %arg4[%c2_12, %c0_13, %c0_14] : memref<3x8x8xf32, #tpu.memory_space<vmem>>, vector<1x8x8xf32>
    %11 = vector.shape_cast %10 : vector<1x8x8xf32> to vector<8x8xf32>
    %c0_15 = arith.constant 0 : index
    %c0_16 = arith.constant 0 : index
    %12 = vector.load %arg3[%c0_15, %c0_16] : memref<8x1xf32, #tpu.memory_space<vmem>>, vector<8x1xf32>
    %c0_17 = arith.constant 0 : index
    %c0_18 = arith.constant 0 : index
    %13 = vector.load %arg5[%c0_17, %c0_18] : memref<8x1xf32, #tpu.memory_space<vmem>>, vector<8x1xf32>
    %14 = tpu.iota {dimensions = array<i32: 1>} : vector<8x256xi32>
    %c0_i32 = arith.constant 0 : i32
    %15 = vector.broadcast %c0_i32 : i32 to vector<8x256xi32>
    %16 = arith.cmpi eq, %14, %15 : vector<8x256xi32>
    %c255_i32 = arith.constant 255 : i32
    %17 = vector.broadcast %c255_i32 : i32 to vector<8x256xi32>
    %18 = arith.cmpi eq, %14, %17 : vector<8x256xi32>
    %c0_i32_19 = arith.constant 0 : i32
    %c2_i32 = arith.constant 2 : i32
    %19 = arith.addi %c0_i32_19, %c2_i32 : i32
    %c1_i32 = arith.constant 1 : i32
    scf.for %arg7 = %c0_i32_19 to %19 step %c1_i32  : i32 {
      %c1_i32_21 = arith.constant 1 : i32
      %20 = arith.muli %arg7, %c1_i32_21 : i32
      %c0_i32_22 = arith.constant 0 : i32
      %21 = arith.addi %c0_i32_22, %20 : i32
      %22 = arith.index_cast %21 : i32 to index
      %c0_23 = arith.constant 0 : index
      %c0_24 = arith.constant 0 : index
      %23 = vector.load %arg1[%22, %c0_23, %c0_24] : memref<2x8x256xf32, #tpu.memory_space<vmem>>, vector<1x8x256xf32>
      %24 = vector.shape_cast %23 : vector<1x8x256xf32> to vector<8x256xf32>
      %c1_i32_25 = arith.constant 1 : i32
      %25 = tpu.dynamic_rotate %24 by %c1_i32_25 dim 1 : vector<8x256xf32>, i32 -> vector<8x256xf32>
      %cst = arith.constant 0.000000e+00 : f32
      %26 = vector.broadcast %cst : f32 to vector<8x256xf32>
      %27 = arith.select %16, %26, %25 : vector<8x256xi1>, vector<8x256xf32>
      %c255_i32_26 = arith.constant 255 : i32
      %28 = tpu.dynamic_rotate %24 by %c255_i32_26 dim 1 : vector<8x256xf32>, i32 -> vector<8x256xf32>
      %cst_27 = arith.constant 0.000000e+00 : f32
      %29 = vector.broadcast %cst_27 : f32 to vector<8x256xf32>
      %30 = arith.select %18, %29, %28 : vector<8x256xi1>, vector<8x256xf32>
      %cst_28 = arith.constant dense<0.000000e+00> : vector<8x256xf32>
      %31 = tpu.matmul %1, %27, %cst_28 {dimension_numbers = #tpu.dot_dimension_numbers<[1], [0], [0], [1], [0, 0, 1, 1], [], []>} : vector<8x8xf32>, vector<8x256xf32>, vector<8x256xf32> -> vector<8x256xf32>
      %cst_29 = arith.constant dense<0.000000e+00> : vector<8x256xf32>
      %32 = tpu.matmul %3, %24, %cst_29 {dimension_numbers = #tpu.dot_dimension_numbers<[1], [0], [0], [1], [0, 0, 1, 1], [], []>} : vector<8x8xf32>, vector<8x256xf32>, vector<8x256xf32> -> vector<8x256xf32>
      %33 = arith.addf %31, %32 : vector<8x256xf32>
      %cst_30 = arith.constant dense<0.000000e+00> : vector<8x256xf32>
      %34 = tpu.matmul %5, %30, %cst_30 {dimension_numbers = #tpu.dot_dimension_numbers<[1], [0], [0], [1], [0, 0, 1, 1], [], []>} : vector<8x8xf32>, vector<8x256xf32>, vector<8x256xf32> -> vector<8x256xf32>
      %35 = arith.addf %33, %34 : vector<8x256xf32>
      %36 = vector.broadcast %12 : vector<8x1xf32> to vector<8x256xf32>
      %37 = arith.addf %35, %36 : vector<8x256xf32>
      %cst_31 = arith.constant 0.000000e+00 : f32
      %38 = vector.broadcast %cst_31 : f32 to vector<8x256xf32>
      %39 = arith.maximumf %37, %38 : vector<8x256xf32>
      %c1_i32_32 = arith.constant 1 : i32
      %40 = tpu.dynamic_rotate %39 by %c1_i32_32 dim 1 : vector<8x256xf32>, i32 -> vector<8x256xf32>
      %cst_33 = arith.constant 0.000000e+00 : f32
      %41 = vector.broadcast %cst_33 : f32 to vector<8x256xf32>
      %42 = arith.select %16, %41, %40 : vector<8x256xi1>, vector<8x256xf32>
      %c255_i32_34 = arith.constant 255 : i32
      %43 = tpu.dynamic_rotate %39 by %c255_i32_34 dim 1 : vector<8x256xf32>, i32 -> vector<8x256xf32>
      %cst_35 = arith.constant 0.000000e+00 : f32
      %44 = vector.broadcast %cst_35 : f32 to vector<8x256xf32>
      %45 = arith.select %18, %44, %43 : vector<8x256xi1>, vector<8x256xf32>
      %cst_36 = arith.constant dense<0.000000e+00> : vector<8x256xf32>
      %46 = tpu.matmul %7, %42, %cst_36 {dimension_numbers = #tpu.dot_dimension_numbers<[1], [0], [0], [1], [0, 0, 1, 1], [], []>} : vector<8x8xf32>, vector<8x256xf32>, vector<8x256xf32> -> vector<8x256xf32>
      %cst_37 = arith.constant dense<0.000000e+00> : vector<8x256xf32>
      %47 = tpu.matmul %9, %39, %cst_37 {dimension_numbers = #tpu.dot_dimension_numbers<[1], [0], [0], [1], [0, 0, 1, 1], [], []>} : vector<8x8xf32>, vector<8x256xf32>, vector<8x256xf32> -> vector<8x256xf32>
      %48 = arith.addf %46, %47 : vector<8x256xf32>
      %cst_38 = arith.constant dense<0.000000e+00> : vector<8x256xf32>
      %49 = tpu.matmul %11, %45, %cst_38 {dimension_numbers = #tpu.dot_dimension_numbers<[1], [0], [0], [1], [0, 0, 1, 1], [], []>} : vector<8x8xf32>, vector<8x256xf32>, vector<8x256xf32> -> vector<8x256xf32>
      %50 = arith.addf %48, %49 : vector<8x256xf32>
      %51 = vector.broadcast %13 : vector<8x1xf32> to vector<8x256xf32>
      %52 = arith.addf %50, %51 : vector<8x256xf32>
      %53 = arith.addf %52, %24 : vector<8x256xf32>
      %cst_39 = arith.constant 0.000000e+00 : f32
      %54 = vector.broadcast %cst_39 : f32 to vector<8x256xf32>
      %55 = arith.maximumf %53, %54 : vector<8x256xf32>
      %56 = arith.index_cast %21 : i32 to index
      %c0_40 = arith.constant 0 : index
      %c0_41 = arith.constant 0 : index
      %57 = vector.load %arg6[%56, %c0_40, %c0_41] : memref<2x8x256xf32, #tpu.memory_space<vmem>>, vector<1x8x256xf32>
      %58 = vector.shape_cast %57 : vector<1x8x256xf32> to vector<8x256xf32>
      %59 = vector.shape_cast %55 : vector<8x256xf32> to vector<1x8x256xf32>
      tpu.vector_store %arg6[%56, %c0_40, %c0_41], %59 {strides = array<i32>} : memref<2x8x256xf32, #tpu.memory_space<vmem>>, vector<1x8x256xf32>,
    }
    %c2_i32_20 = arith.constant 2 : i32
    return
  }
  func.func @transform_0(%arg0: i32) -> (i32, i32, i32) {
    %c0_i32 = arith.constant 0 : i32
    %c0_i32_0 = arith.constant 0 : i32
    %c0_i32_1 = arith.constant 0 : i32
    return %arg0, %c0_i32, %c0_i32_0 : i32, i32, i32
  }
  func.func @transform_1(%arg0: i32) -> (i32, i32, i32) {
    %c0_i32 = arith.constant 0 : i32
    %c0_i32_0 = arith.constant 0 : i32
    %c0_i32_1 = arith.constant 0 : i32
    %c0_i32_2 = arith.constant 0 : i32
    return %c0_i32, %c0_i32_0, %c0_i32_1 : i32, i32, i32
  }
  func.func @transform_2(%arg0: i32) -> (i32, i32) {
    %c0_i32 = arith.constant 0 : i32
    %c0_i32_0 = arith.constant 0 : i32
    %c0_i32_1 = arith.constant 0 : i32
    return %c0_i32, %c0_i32_0 : i32, i32
  }
  func.func @transform_3(%arg0: i32) -> (i32, i32, i32) {
    %c0_i32 = arith.constant 0 : i32
    %c0_i32_0 = arith.constant 0 : i32
    %c0_i32_1 = arith.constant 0 : i32
    %c0_i32_2 = arith.constant 0 : i32
    return %c0_i32, %c0_i32_0, %c0_i32_1 : i32, i32, i32
  }
  func.func @transform_4(%arg0: i32) -> (i32, i32) {
    %c0_i32 = arith.constant 0 : i32
    %c0_i32_0 = arith.constant 0 : i32
    %c0_i32_1 = arith.constant 0 : i32
    return %c0_i32, %c0_i32_0 : i32, i32
  }
  func.func @transform_5(%arg0: i32) -> (i32, i32, i32) {
    %c0_i32 = arith.constant 0 : i32
    %c0_i32_0 = arith.constant 0 : i32
    %c0_i32_1 = arith.constant 0 : i32
    return %arg0, %c0_i32, %c0_i32_0 : i32, i32, i32
  }
}

</mosaic_0001>

<llo_original>
// kernel: tpu_custom_call.1
$region0: #{tpu_custom_call.1}
  #allocation0 [shape = 'u32[]', space=smem, size = 0x4, offset = 0x4, fixed_abs, tag = 'smem constant byte address 0x4 - core index']
  #allocation1 [shape = 'u32[144,128]{1,0:T(1,128)}', space=vmem, size = 0x12000, scoped, tag = 'internal scratch']
  %s0 = inlined_call_operand.hbm [shape: f32[4,8,256], index: 0, kind: input, shape index: {}]
  %s1 = inlined_call_operand.hbm [shape: f32[3,8,8], index: 1, kind: input, shape index: {}]
  %s2 = inlined_call_operand.vmem [shape: f32[8,1], index: 2, kind: input, shape index: {}]
  %s3 = inlined_call_operand.hbm [shape: f32[3,8,8], index: 3, kind: input, shape index: {}]
  %s4 = inlined_call_operand.vmem [shape: f32[8,1], index: 4, kind: input, shape index: {}]
  %s5 = inlined_call_operand.hbm [shape: f32[4,8,256], index: 5, kind: output, shape index: {}]
  %s6 = sld [smem:[#allocation0]]
  $region72: #{tpu_custom_call.1} parent=0
    _
  %s8 = ssub.s32 1, %s6
  %s9 = scalar_select 0, %s8, %s6
  $region1: #{tpu_custom_call.1} parent=0
    #allocation2 [shape = 'u8[32768]{0}', space=vmem, size = 0x8000, scoped, tag = 'input window, operand 0']
    #allocation3 [shape = 's32[2]{0}', space=sflag, size = 0x8, scoped, tag = 'scoped memory for tpu_custom_call.1']
    #allocation4 [shape = 's32[2]{0}', space=sflag, size = 0x8, scoped, tag = 'scoped memory for tpu_custom_call.1']
    #allocation5 [shape = 'u8[12288]{0}', space=vmem, size = 0x3000, scoped, tag = 'input window, operand 1, single buffered']
    #allocation6 [shape = 's32[1]{0}', space=sflag, size = 0x4, scoped, tag = 'scoped memory for tpu_custom_call.1']
    #allocation7 [shape = 'u8[12288]{0}', space=vmem, size = 0x3000, scoped, tag = 'input window, operand 3, single buffered']
    #allocation8 [shape = 'u8[32768]{0}', space=vmem, size = 0x8000, scoped, tag = 'output window, operand 0']
    %10 = vsyncpa [#allocation3], 0
    %s11 = scalar_lea.sflag [#allocation3], 1
    %12 = vsyncpa %s11, 0
    %13 = vsyncpa [#allocation6], 0
    %14 = vsyncpa [#allocation4], 0
    %s15 = scalar_lea.sflag [#allocation4], 1
    %16 = vsyncpa %s15, 0
    loop: start=0, step=1, limit=4
    $region2: #{tpu_custom_call.1} parent=1 // loop_pre_header
      _
    $region3: #{tpu_custom_call.1} parent=1 // loop_header
      %s18 = sphi 0, %s22
      %p19 = scmp.ge.s32.totalorder %s18, 4
      %s28 = sphi 0, %s30
      %s31 = sphi 0, %s28
      %s32 = sphi 0, %s31
      %s48 = sphi 0, %s32
      %s52 = sphi 0, %s52
      %s54 = sphi 0, %s52
      %s55 = sphi 0, %s54
      %s69 = sphi 0, %s55
      %s73 = sphi 0, %s73
      %s75 = sphi 0, %s73
      %s76 = sphi 0, %s75
      %s90 = sphi 0, %s76
      %s94 = sphi 0, %s94
      %s96 = sphi 0, %s94
      %s97 = sphi 0, %s96
      %s111 = sphi 0, %s97
      %s115 = sphi 0, %s115
      %s117 = sphi 0, %s115
      %s118 = sphi 0, %s117
      %s132 = sphi 0, %s118
      %s138 = sphi 0, %s140
      %s141 = sphi 0, %s138
      %s142 = sphi 0, %s141
      %s158 = sphi 0, %s142
    $region4: #{tpu_custom_call.1} parent=1 // loop_header_branch
      %21 = sbr.rel (%p19) target = $region8
    $region5: #{tpu_custom_call.1} parent=1 // loop_body
      %s23 = ssub.s32 %s18, 1
      %s24 = ssub.s32 %s18, 2
      %s25 = sadd.s32 %s18, 1
      %s26 = ssub.s32 %s18, %s25
      %p27 = scmp.eq.s32.totalorder %s26, 0
      %s29 = sadd.s32 %s28, 1
      %s30 = scalar_select %p27, %s28, %s29
      %p33 = pneg %p27
      %p34 = scmp.eq.s32.totalorder %s18, 1
      %p35 = por %p33, %p34
      %p36 = scmp.ne.s32.totalorder %s28, %s31
      %p37 = scmp.eq.s32.totalorder %s18, 0
      %p38 = por %p36, %p37
      %p39 = scmp.ne.s32.totalorder %s28, %s31
      %p40 = scmp.eq.s32.totalorder %s23, 1
      %p41 = por %p39, %p40
      %p42 = scmp.ne.s32.totalorder %s31, %s32
      %p43 = scmp.eq.s32.totalorder %s23, 0
      %p44 = por %p42, %p43
      %p45 = scmp.ne.s32.totalorder %s31, %s32
      %p46 = scmp.eq.s32.totalorder %s24, 1
      %p47 = por %p45, %p46
      %p49 = scmp.ne.s32.totalorder %s32, %s48
      %p50 = scmp.eq.s32.totalorder %s24, 0
      %p51 = por %p49, %p50
      %s53 = sadd.s32 %s52, 1
      %p56 = scmp.eq.s32.totalorder %s18, 1
      %p57 = scmp.ne.s32.totalorder %s52, %s54
      %p58 = scmp.eq.s32.totalorder %s18, 0
      %p59 = por %p57, %p58
      %p60 = scmp.ne.s32.totalorder %s52, %s54
      %p61 = scmp.eq.s32.totalorder %s23, 1
      %p62 = por %p60, %p61
      %p63 = scmp.ne.s32.totalorder %s54, %s55
      %p64 = scmp.eq.s32.totalorder %s23, 0
      %p65 = por %p63, %p64
      %p66 = scmp.ne.s32.totalorder %s54, %s55
      %p67 = scmp.eq.s32.totalorder %s24, 1
      %p68 = por %p66, %p67
      %p70 = scmp.ne.s32.totalorder %s55, %s69
      %p71 = scmp.eq.s32.totalorder %s24, 0
      %p72 = por %p70, %p71
      %s74 = sadd.s32 %s73, 1
      %p77 = scmp.eq.s32.totalorder %s18, 1
      %p78 = scmp.ne.s32.totalorder %s73, %s75
      %p79 = scmp.eq.s32.totalorder %s18, 0
      %p80 = por %p78, %p79
      %p81 = scmp.ne.s32.totalorder %s73, %s75
      %p82 = scmp.eq.s32.totalorder %s23, 1
      %p83 = por %p81, %p82
      %p84 = scmp.ne.s32.totalorder %s75, %s76
      %p85 = scmp.eq.s32.totalorder %s23, 0
      %p86 = por %p84, %p85
      %p87 = scmp.ne.s32.totalorder %s75, %s76
      %p88 = scmp.eq.s32.totalorder %s24, 1
      %p89 = por %p87, %p88
      %p91 = scmp.ne.s32.totalorder %s76, %s90
      %p92 = scmp.eq.s32.totalorder %s24, 0
      %p93 = por %p91, %p92
      %s95 = sadd.s32 %s94, 1
      %p98 = scmp.eq.s32.totalorder %s18, 1
      %p99 = scmp.ne.s32.totalorder %s94, %s96
      %p100 = scmp.eq.s32.totalorder %s18, 0
      %p101 = por %p99, %p100
      %p102 = scmp.ne.s32.totalorder %s94, %s96
      %p103 = scmp.eq.s32.totalorder %s23, 1
      %p104 = por %p102, %p103
      %p105 = scmp.ne.s32.totalorder %s96, %s97
      %p106 = scmp.eq.s32.totalorder %s23, 0
      %p107 = por %p105, %p106
      %p108 = scmp.ne.s32.totalorder %s96, %s97
      %p109 = scmp.eq.s32.totalorder %s24, 1
      %p110 = por %p108, %p109
      %p112 = scmp.ne.s32.totalorder %s97, %s111
      %p113 = scmp.eq.s32.totalorder %s24, 0
      %p114 = por %p112, %p113
      %s116 = sadd.s32 %s115, 1
      %p119 = scmp.eq.s32.totalorder %s18, 1
      %p120 = scmp.ne.s32.totalorder %s115, %s117
      %p121 = scmp.eq.s32.totalorder %s18, 0
      %p122 = por %p120, %p121
      %p123 = scmp.ne.s32.totalorder %s115, %s117
      %p124 = scmp.eq.s32.totalorder %s23, 1
      %p125 = por %p123, %p124
      %p126 = scmp.ne.s32.totalorder %s117, %s118
      %p127 = scmp.eq.s32.totalorder %s23, 0
      %p128 = por %p126, %p127
      %p129 = scmp.ne.s32.totalorder %s117, %s118
      %p130 = scmp.eq.s32.totalorder %s24, 1
      %p131 = por %p129, %p130
      %p133 = scmp.ne.s32.totalorder %s118, %s132
      %p134 = scmp.eq.s32.totalorder %s24, 0
      %p135 = por %p133, %p134
      %s136 = ssub.s32 %s18, %s25
      %p137 = scmp.eq.s32.totalorder %s136, 0
      %s139 = sadd.s32 %s138, 1
      %s140 = scalar_select %p137, %s138, %s139
      %p143 = pneg %p137
      %p144 = scmp.eq.s32.totalorder %s18, 1
      %p145 = por %p143, %p144
      %p146 = scmp.ne.s32.totalorder %s138, %s141
      %p147 = scmp.eq.s32.totalorder %s18, 0
      %p148 = por %p146, %p147
      %p149 = scmp.ne.s32.totalorder %s138, %s141
      %p150 = scmp.eq.s32.totalorder %s23, 1
      %p151 = por %p149, %p150
      %p152 = scmp.ne.s32.totalorder %s141, %s142
      %p153 = scmp.eq.s32.totalorder %s23, 0
      %p154 = por %p152, %p153
      %p155 = scmp.ne.s32.totalorder %s141, %s142
      %p156 = scmp.eq.s32.totalorder %s24, 1
      %p157 = por %p155, %p156
      %p159 = scmp.ne.s32.totalorder %s142, %s158
      %p160 = scmp.eq.s32.totalorder %s24, 0
      %p161 = por %p159, %p160
      %p162 = scmp.le.s32.totalorder 1, %s18
      %p163 = scmp.lt.s32.totalorder %s18, 3
      %p164 = pnand %p162, %p163
      %p165 = pneg %p164
      // Predicated region
      $region9: #{tpu_custom_call.1} parent=5 // pred_check
        _
      $region10: #{tpu_custom_call.1} parent=5 // pred_check_branch
        %167 = sbr.rel (%p164) target = $region12
      $region11: #{tpu_custom_call.1} parent=5 // pred_region
        %s168 = ssub.s32 %s18, 1
        // Predicated region
        $region13: #{tpu_custom_call.1} parent=11 // pred_check
          %p169 = pneg %p65
        $region14: #{tpu_custom_call.1} parent=11 // pred_check_branch
          %171 = sbr.rel (%p169) target = $region16
        $region15: #{tpu_custom_call.1} parent=11 // pred_region
          %s173 = ssub.s32 384, 384
          %174 = vsyncadd [#allocation6], %s173
          %s175 = sshll.u32 [#allocation5], 4
          %s176 = int_to_ptr.vmem [resolvable:$true] %s175
          %181 = dma.hbm_to_vmem [thread:$0]  %s1, 384, %s176, [#allocation6], 128, 128, 8
        $region16: #{tpu_custom_call.1} parent=11 // pred_fallthru
          _
        // Predicated region
        $region17: #{tpu_custom_call.1} parent=11 // pred_check
          %p182 = pneg %p86
        $region18: #{tpu_custom_call.1} parent=11 // pred_check_branch
          %184 = sbr.rel (%p182) target = $region20
        $region19: #{tpu_custom_call.1} parent=11 // pred_region
          _
        $region20: #{tpu_custom_call.1} parent=11 // pred_fallthru
          _
        // Predicated region
        $region21: #{tpu_custom_call.1} parent=11 // pred_check
          %p185 = pneg %p107
        $region22: #{tpu_custom_call.1} parent=11 // pred_check_branch
          %187 = sbr.rel (%p185) target = $region24
        $region23: #{tpu_custom_call.1} parent=11 // pred_region
          %s189 = ssub.s32 384, 384
          %190 = vsyncadd [#allocation6], %s189
          %s191 = sshll.u32 [#allocation7], 4
          %s192 = int_to_ptr.vmem [resolvable:$true] %s191
          %197 = dma.hbm_to_vmem [thread:$0]  %s3, 384, %s192, [#allocation6], 128, 128, 8
        $region24: #{tpu_custom_call.1} parent=11 // pred_fallthru
          _
        // Predicated region
        $region25: #{tpu_custom_call.1} parent=11 // pred_check
          %p198 = pneg %p128
        $region26: #{tpu_custom_call.1} parent=11 // pred_check_branch
          %200 = sbr.rel (%p198) target = $region28
        $region27: #{tpu_custom_call.1} parent=11 // pred_region
          _
        $region28: #{tpu_custom_call.1} parent=11 // pred_fallthru
          _
      $region12: #{tpu_custom_call.1} parent=5 // pred_fallthru
        _
      %p201 = scmp.lt.s32.totalorder %s18, 2
      // Predicated region
      $region29: #{tpu_custom_call.1} parent=5 // pred_check
        %p202 = pneg %p201
      $region30: #{tpu_custom_call.1} parent=5 // pred_check_branch
        %204 = sbr.rel (%p202) target = $region32
      $region31: #{tpu_custom_call.1} parent=5 // pred_region
        // Predicated region
        $region33: #{tpu_custom_call.1} parent=31 // pred_check
          %p205 = pneg %p38
        $region34: #{tpu_custom_call.1} parent=31 // pred_check_branch
          %207 = sbr.rel (%p205) target = $region36
        $region35: #{tpu_custom_call.1} parent=31 // pred_region
          %s208 = sand.u32 %s28, 1
          %s209 = scalar_lea.sflag [#allocation3], %s208
          %s210 = sand.u32 %s28, 1
          %s211 = smul.addr %s210, 32
          %s212 = scalar_lea.vmem [#allocation2], %s211
          %s213 = smul.u32 2, %s18
          %s215 = ssub.s32 512, 512
          %216 = vsyncadd %s209, %s215
          %s217 = smul.addr %s213, 2
          %s218 = smul.addr %s217, 128
          %s219 = scalar_lea.hbm %s0, %s218
          %s220 = sshll.u32 %s212, 4
          %s221 = int_to_ptr.vmem [resolvable:$true] %s220
          %226 = dma.hbm_to_vmem [thread:$0]  %s219, 512, %s221, %s209, 256, 256, 16
        $region36: #{tpu_custom_call.1} parent=31 // pred_fallthru
          _
      $region32: #{tpu_custom_call.1} parent=5 // pred_fallthru
        _
      %p227 = scmp.le.s32.totalorder 1, %s18
      %p228 = scmp.lt.s32.totalorder %s18, 3
      %p229 = pnand %p227, %p228
      %p230 = pneg %p229
      // Predicated region
      $region37: #{tpu_custom_call.1} parent=5 // pred_check
        _
      $region38: #{tpu_custom_call.1} parent=5 // pred_check_branch
        %232 = sbr.rel (%p229) target = $region40
      $region39: #{tpu_custom_call.1} parent=5 // pred_region
        %s233 = ssub.s32 %s18, 1
        %s234 = sand.u32 %s31, 1
        %s235 = scalar_lea.sflag [#allocation3], %s234
        %s236 = sand.u32 %s31, 1
        %s237 = smul.addr %s236, 32
        %s238 = scalar_lea.vmem [#allocation2], %s237
        // Predicated region
        $region41: #{tpu_custom_call.1} parent=39 // pred_check
          %p239 = pneg %p44
        $region42: #{tpu_custom_call.1} parent=39 // pred_check_branch
          %241 = sbr.rel (%p239) target = $region44
        $region43: #{tpu_custom_call.1} parent=39 // pred_region
          %242 = dma.done %s235, 512
        $region44: #{tpu_custom_call.1} parent=39 // pred_fallthru
          _
        // Predicated region
        $region45: #{tpu_custom_call.1} parent=39 // pred_check
          %p243 = pneg %p65
        $region46: #{tpu_custom_call.1} parent=39 // pred_check_branch
          %245 = sbr.rel (%p243) target = $region48
        $region47: #{tpu_custom_call.1} parent=39 // pred_region
          %246 = dma.done [#allocation6], 384
        $region48: #{tpu_custom_call.1} parent=39 // pred_fallthru
          _
        // Predicated region
        $region49: #{tpu_custom_call.1} parent=39 // pred_check
          %p247 = pneg %p107
        $region50: #{tpu_custom_call.1} parent=39 // pred_check_branch
          %249 = sbr.rel (%p247) target = $region52
        $region51: #{tpu_custom_call.1} parent=39 // pred_region
          %250 = dma.done [#allocation6], 384
        $region52: #{tpu_custom_call.1} parent=39 // pred_fallthru
          _
        %s251 = sand.u32 %s31, 1
        %s252 = scalar_lea.sflag [#allocation3], %s251
        %s253 = sand.u32 %s31, 1
        %s254 = smul.addr %s253, 32
        %s255 = scalar_lea.vmem [#allocation2], %s254
        %p256 = pneg %p44
        %p257 = pneg %p41
        %p258 = pneg %p65
        %p259 = pneg %p62
        %p260 = pneg %p86
        %p261 = pneg %p83
        %p262 = pneg %p107
        %p263 = pneg %p104
        %p264 = pneg %p128
        %p265 = pneg %p125
        %p266 = pneg %p154
        %p267 = pneg %p151
        %s268 = sand.u32 %s141, 1
        %s269 = scalar_lea.sflag [#allocation4], %s268
        %s270 = sand.u32 %s141, 1
        %s271 = smul.addr %s270, 32
        %s272 = scalar_lea.vmem [#allocation8], %s271
        %s273 = smul.u32 2, %s23
        %s274 = smul.u32 2, %s23
        %v275 = vld [vmem:[#allocation5] sm:$0xff]
        %s276 = scalar_lea.vmem [#allocation5], 8
        %v277 = vld [vmem:[%s276] sm:$0xff]
        %s278 = scalar_lea.vmem [#allocation5], 16
        %v279 = vld [vmem:[%s278] sm:$0xff]
        %v280 = vld [vmem:[#allocation7] sm:$0xff]
        %s281 = scalar_lea.vmem [#allocation7], 8
        %v282 = vld [vmem:[%s281] sm:$0xff]
        %s283 = scalar_lea.vmem [#allocation7], 16
        %v284 = vld [vmem:[%s283] sm:$0xff]
        %v285 = vld [vmem:[%s2] sm:$0xff]
        %v286 = vld [vmem:[%s4] sm:$0xff]
        %v287 = vlaneseq
        %v288 = vand.u32 %v287, 127
        %v289 = vadd.s32 %v288, 128
        %vm290 = vcmp.eq.s32.totalorder %v288, 0
        %vm291 = vcmp.eq.s32.totalorder %v289, 0
        %vm292 = vcmp.eq.s32.totalorder %v288, 255
        %vm293 = vcmp.eq.s32.totalorder %v289, 255
        loop: start=0, step=1, limit=2
        $region53: #{tpu_custom_call.1} parent=39 // loop_pre_header
          _
        $region54: #{tpu_custom_call.1} parent=39 // loop_header
          %s295 = sphi 0, %s299
          %p296 = scmp.ge.s32.totalorder %s295, 2
        $region55: #{tpu_custom_call.1} parent=39 // loop_header_branch
          %298 = sbr.rel (%p296) target = $region59
        $region56: #{tpu_custom_call.1} parent=39 // loop_body
          %s300 = smul.u32 %s295, 2
          %s301 = smul.addr %s300, 8
          %s302 = scalar_lea.vmem %s238, %s301 [#allocation2]
          %v303 = vld [vmem:[%s302] sm:$0xff]
          %v304 = vld [vmem:[%s302 + $0x8] sm:$0xff]
          %305 = vrot.lane.b32.xlu0 %v303, 1
          %v306 = vpop.permute.xlu0 %305
          %307 = vrot.lane.b32.xlu0 %v304, 1
          %v308 = vpop.permute.xlu0 %307
          %vm309 = vcmp.lt.s32.totalorder %v288, 1
          %v310 = vsel %vm309, %v306, %v308
          %v311 = vsel %vm309, %v308, %v306
          %v312 = vsel %vm290, 0.0, %v311
          %v313 = vsel %vm291, 0.0, %v310
          %314 = vrot.lane.b32.xlu0 %v303, 127
          %v315 = vpop.permute.xlu0 %314
          %316 = vrot.lane.b32.xlu0 %v304, 127
          %v317 = vpop.permute.xlu0 %316
          %vm318 = vcmp.lt.s32.totalorder %v288, 127
          %v319 = vsel %vm318, %v315, %v317
          %v320 = vsel %vm318, %v317, %v315
          %v321 = vsel %vm292, 0.0, %v319
          %v322 = vsel %vm293, 0.0, %v320
          %vm323 = vcmask 64512
          %v325 = vsel %vm323, %v277, 0
          %327 = vmatprep.subr.mxu0 0.0
          %328 = vmatpush1.msra.mxu0 0.0
          %329 = vmatprep.subr.mxu0 0.0
          %330 = vmatpush1.msra.mxu0 0.0
          %331 = vmatprep.subr.mxu0 0.0
          %332 = vmatpush1.msra.mxu0 0.0
          %333 = vmatprep.subr.mxu0 0.0
          %334 = vmatpush1.msra.mxu0 0.0
          %335 = vmatprep.subr.mxu0 0.0
          %336 = vmatpush1.msra.mxu0 0.0
          %337 = vmatprep.subr.mxu0 0.0
          %338 = vmatpush1.msra.mxu0 0.0
          %339 = vmatprep.subr.mxu0 0.0
          %340 = vmatpush1.msra.mxu0 0.0
          %341 = vmatprep.subr.mxu0 0.0
          %342 = vmatpush1.msra.mxu0 0.0
          %343 = vmatprep.subr.mxu0 0.0
          %344 = vmatpush1.msra.mxu0 0.0
          %345 = vmatprep.subr.mxu0 0.0
          %346 = vmatpush1.msra.mxu0 0.0
          %347 = vmatprep.subr.mxu0 0.0
          %348 = vmatpush1.msra.mxu0 0.0
          %349 = vmatprep.subr.mxu0 0.0
          %350 = vmatpush1.msra.mxu0 0.0
          %351 = vmatprep.subr.mxu0 0.0
          %352 = vmatpush1.msra.mxu0 0.0
          %353 = vmatprep.subr.mxu0 0.0
          %354 = vmatpush1.msra.mxu0 0.0
          %355 = vmatprep.subr.mxu0 0.0
          %356 = vmatpush1.msra.mxu0 0.0
          %357 = vmatprep.subr.mxu0 %v304
          %358 = vmatpush1.msra.mxu0 %v303
          %359 = vmatprep.subr.mxu0 0.0
          %360 = vmatpush2.msra.mxu0 0.0
          %361 = vmatprep.subr.mxu0 0.0
          %362 = vmatpush2.msra.mxu0 0.0
          %363 = vmatprep.subr.mxu0 0.0
          %364 = vmatpush2.msra.mxu0 0.0
          %365 = vmatprep.subr.mxu0 0.0
          %366 = vmatpush2.msra.mxu0 0.0
          %367 = vmatprep.subr.mxu0 0.0
          %368 = vmatpush2.msra.mxu0 0.0
          %369 = vmatprep.subr.mxu0 0.0
          %370 = vmatpush2.msra.mxu0 0.0
          %371 = vmatprep.subr.mxu0 0.0
          %372 = vmatpush2.msra.mxu0 0.0
          %373 = vmatprep.subr.mxu0 0.0
          %374 = vmatpush2.msra.mxu0 0.0
          %375 = vmatprep.subr.mxu0 0.0
          %376 = vmatpush2.msra.mxu0 0.0
          %377 = vmatprep.subr.mxu0 0.0
          %378 = vmatpush2.msra.mxu0 0.0
          %379 = vmatprep.subr.mxu0 0.0
          %380 = vmatpush2.msra.mxu0 0.0
          %381 = vmatprep.subr.mxu0 0.0
          %382 = vmatpush2.msra.mxu0 0.0
          %383 = vmatprep.subr.mxu0 0.0
          %384 = vmatpush2.msra.mxu0 0.0
          %385 = vmatprep.subr.mxu0 0.0
          %386 = vmatpush2.msra.mxu0 0.0
          %387 = vmatprep.subr.mxu0 0.0
          %388 = vmatpush2.msra.mxu0 0.0
          %389 = vmatprep.subr.mxu0 0.0
          %390 = vmatpush2.msra.mxu0 0.0
          %391 = vmatprep.mubr.f32.mxu0 0.0
          %392 = vmatmul.mubr.f32.gmra.mxu0 %v325
          %v393 = vpop.f32.mrf.mxu0
          %v394 = vadd.f32 0.0, %v393
          %v395 = vpop.f32.mrf.mxu0
          %v396 = vadd.f32 0.0, %v395
          %397 = vdwg.mxu0
          %v399 = vsel %vm323, %v275, 0
          %401 = vmatprep.subr.mxu0 0.0
          %402 = vmatpush1.msra.mxu0 0.0
          %403 = vmatprep.subr.mxu0 0.0
          %404 = vmatpush1.msra.mxu0 0.0
          %405 = vmatprep.subr.mxu0 0.0
          %406 = vmatpush1.msra.mxu0 0.0
          %407 = vmatprep.subr.mxu0 0.0
          %408 = vmatpush1.msra.mxu0 0.0
          %409 = vmatprep.subr.mxu0 0.0
          %410 = vmatpush1.msra.mxu0 0.0
          %411 = vmatprep.subr.mxu0 0.0
          %412 = vmatpush1.msra.mxu0 0.0
          %413 = vmatprep.subr.mxu0 0.0
          %414 = vmatpush1.msra.mxu0 0.0
          %415 = vmatprep.subr.mxu0 0.0
          %416 = vmatpush1.msra.mxu0 0.0
          %417 = vmatprep.subr.mxu0 0.0
          %418 = vmatpush1.msra.mxu0 0.0
          %419 = vmatprep.subr.mxu0 0.0
          %420 = vmatpush1.msra.mxu0 0.0
          %421 = vmatprep.subr.mxu0 0.0
          %422 = vmatpush1.msra.mxu0 0.0
          %423 = vmatprep.subr.mxu0 0.0
          %424 = vmatpush1.msra.mxu0 0.0
          %425 = vmatprep.subr.mxu0 0.0
          %426 = vmatpush1.msra.mxu0 0.0
          %427 = vmatprep.subr.mxu0 0.0
          %428 = vmatpush1.msra.mxu0 0.0
          %429 = vmatprep.subr.mxu0 0.0
          %430 = vmatpush1.msra.mxu0 0.0
          %431 = vmatprep.subr.mxu0 %v313
          %432 = vmatpush1.msra.mxu0 %v312
          %433 = vmatprep.subr.mxu0 0.0
          %434 = vmatpush2.msra.mxu0 0.0
          %435 = vmatprep.subr.mxu0 0.0
          %436 = vmatpush2.msra.mxu0 0.0
          %437 = vmatprep.subr.mxu0 0.0
          %438 = vmatpush2.msra.mxu0 0.0
          %439 = vmatprep.subr.mxu0 0.0
          %440 = vmatpush2.msra.mxu0 0.0
          %441 = vmatprep.subr.mxu0 0.0
          %442 = vmatpush2.msra.mxu0 0.0
          %443 = vmatprep.subr.mxu0 0.0
          %444 = vmatpush2.msra.mxu0 0.0
          %445 = vmatprep.subr.mxu0 0.0
          %446 = vmatpush2.msra.mxu0 0.0
          %447 = vmatprep.subr.mxu0 0.0
          %448 = vmatpush2.msra.mxu0 0.0
          %449 = vmatprep.subr.mxu0 0.0
          %450 = vmatpush2.msra.mxu0 0.0
          %451 = vmatprep.subr.mxu0 0.0
          %452 = vmatpush2.msra.mxu0 0.0
          %453 = vmatprep.subr.mxu0 0.0
          %454 = vmatpush2.msra.mxu0 0.0
          %455 = vmatprep.subr.mxu0 0.0
          %456 = vmatpush2.msra.mxu0 0.0
          %457 = vmatprep.subr.mxu0 0.0
          %458 = vmatpush2.msra.mxu0 0.0
          %459 = vmatprep.subr.mxu0 0.0
          %460 = vmatpush2.msra.mxu0 0.0
          %461 = vmatprep.subr.mxu0 0.0
          %462 = vmatpush2.msra.mxu0 0.0
          %463 = vmatprep.subr.mxu0 0.0
          %464 = vmatpush2.msra.mxu0 0.0
          %465 = vmatprep.mubr.f32.mxu0 0.0
          %466 = vmatmul.mubr.f32.gmra.mxu0 %v399
          %v467 = vpop.f32.mrf.mxu0
          %v468 = vadd.f32 %v394, %v467
          %v469 = vpop.f32.mrf.mxu0
          %v470 = vadd.f32 %v396, %v469
          %471 = vdwg.mxu0
          %v473 = vsel %vm323, %v279, 0
          %475 = vmatprep.subr.mxu0 0.0
          %476 = vmatpush1.msra.mxu0 0.0
          %477 = vmatprep.subr.mxu0 0.0
          %478 = vmatpush1.msra.mxu0 0.0
          %479 = vmatprep.subr.mxu0 0.0
          %480 = vmatpush1.msra.mxu0 0.0
          %481 = vmatprep.subr.mxu0 0.0
          %482 = vmatpush1.msra.mxu0 0.0
          %483 = vmatprep.subr.mxu0 0.0
          %484 = vmatpush1.msra.mxu0 0.0
          %485 = vmatprep.subr.mxu0 0.0
          %486 = vmatpush1.msra.mxu0 0.0
          %487 = vmatprep.subr.mxu0 0.0
          %488 = vmatpush1.msra.mxu0 0.0
          %489 = vmatprep.subr.mxu0 0.0
          %490 = vmatpush1.msra.mxu0 0.0
          %491 = vmatprep.subr.mxu0 0.0
          %492 = vmatpush1.msra.mxu0 0.0
          %493 = vmatprep.subr.mxu0 0.0
          %494 = vmatpush1.msra.mxu0 0.0
          %495 = vmatprep.subr.mxu0 0.0
          %496 = vmatpush1.msra.mxu0 0.0
          %497 = vmatprep.subr.mxu0 0.0
          %498 = vmatpush1.msra.mxu0 0.0
          %499 = vmatprep.subr.mxu0 0.0
          %500 = vmatpush1.msra.mxu0 0.0
          %501 = vmatprep.subr.mxu0 0.0
          %502 = vmatpush1.msra.mxu0 0.0
          %503 = vmatprep.subr.mxu0 0.0
          %504 = vmatpush1.msra.mxu0 0.0
          %505 = vmatprep.subr.mxu0 %v322
          %506 = vmatpush1.msra.mxu0 %v321
          %507 = vmatprep.subr.mxu0 0.0
          %508 = vmatpush2.msra.mxu0 0.0
          %509 = vmatprep.subr.mxu0 0.0
          %510 = vmatpush2.msra.mxu0 0.0
          %511 = vmatprep.subr.mxu0 0.0
          %512 = vmatpush2.msra.mxu0 0.0
          %513 = vmatprep.subr.mxu0 0.0
          %514 = vmatpush2.msra.mxu0 0.0
          %515 = vmatprep.subr.mxu0 0.0
          %516 = vmatpush2.msra.mxu0 0.0
          %517 = vmatprep.subr.mxu0 0.0
          %518 = vmatpush2.msra.mxu0 0.0
          %519 = vmatprep.subr.mxu0 0.0
          %520 = vmatpush2.msra.mxu0 0.0
          %521 = vmatprep.subr.mxu0 0.0
          %522 = vmatpush2.msra.mxu0 0.0
          %523 = vmatprep.subr.mxu0 0.0
          %524 = vmatpush2.msra.mxu0 0.0
          %525 = vmatprep.subr.mxu0 0.0
          %526 = vmatpush2.msra.mxu0 0.0
          %527 = vmatprep.subr.mxu0 0.0
          %528 = vmatpush2.msra.mxu0 0.0
          %529 = vmatprep.subr.mxu0 0.0
          %530 = vmatpush2.msra.mxu0 0.0
          %531 = vmatprep.subr.mxu0 0.0
          %532 = vmatpush2.msra.mxu0 0.0
          %533 = vmatprep.subr.mxu0 0.0
          %534 = vmatpush2.msra.mxu0 0.0
          %535 = vmatprep.subr.mxu0 0.0
          %536 = vmatpush2.msra.mxu0 0.0
          %537 = vmatprep.subr.mxu0 0.0
          %538 = vmatpush2.msra.mxu0 0.0
          %539 = vmatprep.mubr.f32.mxu0 0.0
          %540 = vmatmul.mubr.f32.gmra.mxu0 %v473
          %v541 = vpop.f32.mrf.mxu0
          %v542 = vadd.f32 0.0, %v541
          %v543 = vpop.f32.mrf.mxu0
          %v544 = vadd.f32 0.0, %v543
          %545 = vdwg.mxu0
          %v546 = vadd.f32 %v468, %v542
          %v547 = vadd.f32 %v470, %v544
          %549 = vset.pattern.permute.xlu0 0
          %550 = vperm.xlu0 %549, %v285
          %v551 = vpop.permute.xlu0 %550
          %v553 = vadd.f32 %v546, %v551
          %v554 = vadd.f32 %v547, %v551
          %v555 = vmax.f32 %v553, 0.0
          %v556 = vmax.f32 %v554, 0.0
          %557 = vrot.lane.b32.xlu0 %v555, 1
          %v558 = vpop.permute.xlu0 %557
          %559 = vrot.lane.b32.xlu0 %v556, 1
          %v560 = vpop.permute.xlu0 %559
          %v561 = vsel %vm309, %v558, %v560
          %v562 = vsel %vm309, %v560, %v558
          %v563 = vsel %vm290, 0.0, %v562
          %v564 = vsel %vm291, 0.0, %v561
          %565 = vrot.lane.b32.xlu0 %v555, 127
          %v566 = vpop.permute.xlu0 %565
          %567 = vrot.lane.b32.xlu0 %v556, 127
          %v568 = vpop.permute.xlu0 %567
          %v569 = vsel %vm318, %v566, %v568
          %v570 = vsel %vm318, %v568, %v566
          %v571 = vsel %vm292, 0.0, %v569
          %v572 = vsel %vm293, 0.0, %v570
          %v574 = vsel %vm323, %v282, 0
          %576 = vmatprep.subr.mxu0 0.0
          %577 = vmatpush1.msra.mxu0 0.0
          %578 = vmatprep.subr.mxu0 0.0
          %579 = vmatpush1.msra.mxu0 0.0
          %580 = vmatprep.subr.mxu0 0.0
          %581 = vmatpush1.msra.mxu0 0.0
          %582 = vmatprep.subr.mxu0 0.0
          %583 = vmatpush1.msra.mxu0 0.0
          %584 = vmatprep.subr.mxu0 0.0
          %585 = vmatpush1.msra.mxu0 0.0
          %586 = vmatprep.subr.mxu0 0.0
          %587 = vmatpush1.msra.mxu0 0.0
          %588 = vmatprep.subr.mxu0 0.0
          %589 = vmatpush1.msra.mxu0 0.0
          %590 = vmatprep.subr.mxu0 0.0
          %591 = vmatpush1.msra.mxu0 0.0
          %592 = vmatprep.subr.mxu0 0.0
          %593 = vmatpush1.msra.mxu0 0.0
          %594 = vmatprep.subr.mxu0 0.0
          %595 = vmatpush1.msra.mxu0 0.0
          %596 = vmatprep.subr.mxu0 0.0
          %597 = vmatpush1.msra.mxu0 0.0
          %598 = vmatprep.subr.mxu0 0.0
          %599 = vmatpush1.msra.mxu0 0.0
          %600 = vmatprep.subr.mxu0 0.0
          %601 = vmatpush1.msra.mxu0 0.0
          %602 = vmatprep.subr.mxu0 0.0
          %603 = vmatpush1.msra.mxu0 0.0
          %604 = vmatprep.subr.mxu0 0.0
          %605 = vmatpush1.msra.mxu0 0.0
          %606 = vmatprep.subr.mxu0 %v556
          %607 = vmatpush1.msra.mxu0 %v555
          %608 = vmatprep.subr.mxu0 0.0
          %609 = vmatpush2.msra.mxu0 0.0
          %610 = vmatprep.subr.mxu0 0.0
          %611 = vmatpush2.msra.mxu0 0.0
          %612 = vmatprep.subr.mxu0 0.0
          %613 = vmatpush2.msra.mxu0 0.0
          %614 = vmatprep.subr.mxu0 0.0
          %615 = vmatpush2.msra.mxu0 0.0
          %616 = vmatprep.subr.mxu0 0.0
          %617 = vmatpush2.msra.mxu0 0.0
          %618 = vmatprep.subr.mxu0 0.0
          %619 = vmatpush2.msra.mxu0 0.0
          %620 = vmatprep.subr.mxu0 0.0
          %621 = vmatpush2.msra.mxu0 0.0
          %622 = vmatprep.subr.mxu0 0.0
          %623 = vmatpush2.msra.mxu0 0.0
          %624 = vmatprep.subr.mxu0 0.0
          %625 = vmatpush2.msra.mxu0 0.0
          %626 = vmatprep.subr.mxu0 0.0
          %627 = vmatpush2.msra.mxu0 0.0
          %628 = vmatprep.subr.mxu0 0.0
          %629 = vmatpush2.msra.mxu0 0.0
          %630 = vmatprep.subr.mxu0 0.0
          %631 = vmatpush2.msra.mxu0 0.0
          %632 = vmatprep.subr.mxu0 0.0
          %633 = vmatpush2.msra.mxu0 0.0
          %634 = vmatprep.subr.mxu0 0.0
          %635 = vmatpush2.msra.mxu0 0.0
          %636 = vmatprep.subr.mxu0 0.0
          %637 = vmatpush2.msra.mxu0 0.0
          %638 = vmatprep.subr.mxu0 0.0
          %639 = vmatpush2.msra.mxu0 0.0
          %640 = vmatprep.mubr.f32.mxu0 0.0
          %641 = vmatmul.mubr.f32.gmra.mxu0 %v574
          %v642 = vpop.f32.mrf.mxu0
          %v643 = vadd.f32 0.0, %v642
          %v644 = vpop.f32.mrf.mxu0
          %v645 = vadd.f32 0.0, %v644
          %646 = vdwg.mxu0
          %v648 = vsel %vm323, %v280, 0
          %650 = vmatprep.subr.mxu0 0.0
          %651 = vmatpush1.msra.mxu0 0.0
          %652 = vmatprep.subr.mxu0 0.0
          %653 = vmatpush1.msra.mxu0 0.0
          %654 = vmatprep.subr.mxu0 0.0
          %655 = vmatpush1.msra.mxu0 0.0
          %656 = vmatprep.subr.mxu0 0.0
          %657 = vmatpush1.msra.mxu0 0.0
          %658 = vmatprep.subr.mxu0 0.0
          %659 = vmatpush1.msra.mxu0 0.0
          %660 = vmatprep.subr.mxu0 0.0
          %661 = vmatpush1.msra.mxu0 0.0
          %662 = vmatprep.subr.mxu0 0.0
          %663 = vmatpush1.msra.mxu0 0.0
          %664 = vmatprep.subr.mxu0 0.0
          %665 = vmatpush1.msra.mxu0 0.0
          %666 = vmatprep.subr.mxu0 0.0
          %667 = vmatpush1.msra.mxu0 0.0
          %668 = vmatprep.subr.mxu0 0.0
          %669 = vmatpush1.msra.mxu0 0.0
          %670 = vmatprep.subr.mxu0 0.0
          %671 = vmatpush1.msra.mxu0 0.0
          %672 = vmatprep.subr.mxu0 0.0
          %673 = vmatpush1.msra.mxu0 0.0
          %674 = vmatprep.subr.mxu0 0.0
          %675 = vmatpush1.msra.mxu0 0.0
          %676 = vmatprep.subr.mxu0 0.0
          %677 = vmatpush1.msra.mxu0 0.0
          %678 = vmatprep.subr.mxu0 0.0
          %679 = vmatpush1.msra.mxu0 0.0
          %680 = vmatprep.subr.mxu0 %v564
          %681 = vmatpush1.msra.mxu0 %v563
          %682 = vmatprep.subr.mxu0 0.0
          %683 = vmatpush2.msra.mxu0 0.0
          %684 = vmatprep.subr.mxu0 0.0
          %685 = vmatpush2.msra.mxu0 0.0
          %686 = vmatprep.subr.mxu0 0.0
          %687 = vmatpush2.msra.mxu0 0.0
          %688 = vmatprep.subr.mxu0 0.0
          %689 = vmatpush2.msra.mxu0 0.0
          %690 = vmatprep.subr.mxu0 0.0
          %691 = vmatpush2.msra.mxu0 0.0
          %692 = vmatprep.subr.mxu0 0.0
          %693 = vmatpush2.msra.mxu0 0.0
          %694 = vmatprep.subr.mxu0 0.0
          %695 = vmatpush2.msra.mxu0 0.0
          %696 = vmatprep.subr.mxu0 0.0
          %697 = vmatpush2.msra.mxu0 0.0
          %698 = vmatprep.subr.mxu0 0.0
          %699 = vmatpush2.msra.mxu0 0.0
          %700 = vmatprep.subr.mxu0 0.0
          %701 = vmatpush2.msra.mxu0 0.0
          %702 = vmatprep.subr.mxu0 0.0
          %703 = vmatpush2.msra.mxu0 0.0
          %704 = vmatprep.subr.mxu0 0.0
          %705 = vmatpush2.msra.mxu0 0.0
          %706 = vmatprep.subr.mxu0 0.0
          %707 = vmatpush2.msra.mxu0 0.0
          %708 = vmatprep.subr.mxu0 0.0
          %709 = vmatpush2.msra.mxu0 0.0
          %710 = vmatprep.subr.mxu0 0.0
          %711 = vmatpush2.msra.mxu0 0.0
          %712 = vmatprep.subr.mxu0 0.0
          %713 = vmatpush2.msra.mxu0 0.0
          %714 = vmatprep.mubr.f32.mxu0 0.0
          %715 = vmatmul.mubr.f32.gmra.mxu0 %v648
          %v716 = vpop.f32.mrf.mxu0
          %v717 = vadd.f32 %v643, %v716
          %v718 = vpop.f32.mrf.mxu0
          %v719 = vadd.f32 %v645, %v718
          %720 = vdwg.mxu0
          %v722 = vsel %vm323, %v284, 0
          %724 = vmatprep.subr.mxu0 0.0
          %725 = vmatpush1.msra.mxu0 0.0
          %726 = vmatprep.subr.mxu0 0.0
          %727 = vmatpush1.msra.mxu0 0.0
          %728 = vmatprep.subr.mxu0 0.0
          %729 = vmatpush1.msra.mxu0 0.0
          %730 = vmatprep.subr.mxu0 0.0
          %731 = vmatpush1.msra.mxu0 0.0
          %732 = vmatprep.subr.mxu0 0.0
          %733 = vmatpush1.msra.mxu0 0.0
          %734 = vmatprep.subr.mxu0 0.0
          %735 = vmatpush1.msra.mxu0 0.0
          %736 = vmatprep.subr.mxu0 0.0
          %737 = vmatpush1.msra.mxu0 0.0
          %738 = vmatprep.subr.mxu0 0.0
          %739 = vmatpush1.msra.mxu0 0.0
          %740 = vmatprep.subr.mxu0 0.0
          %741 = vmatpush1.msra.mxu0 0.0
          %742 = vmatprep.subr.mxu0 0.0
          %743 = vmatpush1.msra.mxu0 0.0
          %744 = vmatprep.subr.mxu0 0.0
          %745 = vmatpush1.msra.mxu0 0.0
          %746 = vmatprep.subr.mxu0 0.0
          %747 = vmatpush1.msra.mxu0 0.0
          %748 = vmatprep.subr.mxu0 0.0
          %749 = vmatpush1.msra.mxu0 0.0
          %750 = vmatprep.subr.mxu0 0.0
          %751 = vmatpush1.msra.mxu0 0.0
          %752 = vmatprep.subr.mxu0 0.0
          %753 = vmatpush1.msra.mxu0 0.0
          %754 = vmatprep.subr.mxu0 %v572
          %755 = vmatpush1.msra.mxu0 %v571
          %756 = vmatprep.subr.mxu0 0.0
          %757 = vmatpush2.msra.mxu0 0.0
          %758 = vmatprep.subr.mxu0 0.0
          %759 = vmatpush2.msra.mxu0 0.0
          %760 = vmatprep.subr.mxu0 0.0
          %761 = vmatpush2.msra.mxu0 0.0
          %762 = vmatprep.subr.mxu0 0.0
          %763 = vmatpush2.msra.mxu0 0.0
          %764 = vmatprep.subr.mxu0 0.0
          %765 = vmatpush2.msra.mxu0 0.0
          %766 = vmatprep.subr.mxu0 0.0
          %767 = vmatpush2.msra.mxu0 0.0
          %768 = vmatprep.subr.mxu0 0.0
          %769 = vmatpush2.msra.mxu0 0.0
          %770 = vmatprep.subr.mxu0 0.0
          %771 = vmatpush2.msra.mxu0 0.0
          %772 = vmatprep.subr.mxu0 0.0
          %773 = vmatpush2.msra.mxu0 0.0
          %774 = vmatprep.subr.mxu0 0.0
          %775 = vmatpush2.msra.mxu0 0.0
          %776 = vmatprep.subr.mxu0 0.0
          %777 = vmatpush2.msra.mxu0 0.0
          %778 = vmatprep.subr.mxu0 0.0
          %779 = vmatpush2.msra.mxu0 0.0
          %780 = vmatprep.subr.mxu0 0.0
          %781 = vmatpush2.msra.mxu0 0.0
          %782 = vmatprep.subr.mxu0 0.0
          %783 = vmatpush2.msra.mxu0 0.0
          %784 = vmatprep.subr.mxu0 0.0
          %785 = vmatpush2.msra.mxu0 0.0
          %786 = vmatprep.subr.mxu0 0.0
          %787 = vmatpush2.msra.mxu0 0.0
          %788 = vmatprep.mubr.f32.mxu0 0.0
          %789 = vmatmul.mubr.f32.gmra.mxu0 %v722
          %v790 = vpop.f32.mrf.mxu0
          %v791 = vadd.f32 0.0, %v790
          %v792 = vpop.f32.mrf.mxu0
          %v793 = vadd.f32 0.0, %v792
          %794 = vdwg.mxu0
          %v795 = vadd.f32 %v717, %v791
          %v796 = vadd.f32 %v719, %v793
          %798 = vset.pattern.permute.xlu0 0
          %799 = vperm.xlu0 %798, %v286
          %v800 = vpop.permute.xlu0 %799
          %v802 = vadd.f32 %v795, %v800
          %v803 = vadd.f32 %v796, %v800
          %v804 = vadd.f32 %v802, %v303
          %v805 = vadd.f32 %v803, %v304
          %v806 = vmax.f32 %v804, 0.0
          %v807 = vmax.f32 %v805, 0.0
          %s808 = smul.addr %s300, 8
          %s809 = scalar_lea.vmem %s272, %s808 [#allocation8]
          %810 = vst [vmem:[%s809] sm:$0xff] %v806
          %811 = vst [vmem:[%s809 + $0x8] sm:$0xff] %v807
        $region57: #{tpu_custom_call.1} parent=39 // loop_footer
          %s299 = sadd.s32 1, %s295
        $region58: #{tpu_custom_call.1} parent=39 // loop_footer_branch
          %294 = sbr.rel target = $region54
        $region59: #{tpu_custom_call.1} parent=39 // loop_exit
          _
        %s812 = sand.u32 %s141, 1
        %s813 = scalar_lea.sflag [#allocation4], %s812
        %s814 = sand.u32 %s141, 1
        %s815 = smul.addr %s814, 32
        %s816 = scalar_lea.vmem [#allocation8], %s815
        // Predicated region
        $region60: #{tpu_custom_call.1} parent=39 // pred_check
          %p817 = pneg %p151
        $region61: #{tpu_custom_call.1} parent=39 // pred_check_branch
          %819 = sbr.rel (%p817) target = $region63
        $region62: #{tpu_custom_call.1} parent=39 // pred_region
          %s820 = smul.u32 2, %s23
          %s822 = ssub.s32 512, 512
          %823 = vsyncadd %s813, %s822
          %s824 = smul.addr %s820, 2
          %s825 = smul.addr %s824, 128
          %s826 = scalar_lea.hbm %s5, %s825
          %s827 = sshll.u32 %s816, 4
          %s828 = int_to_ptr.vmem [resolvable:$true] %s827
          %833 = dma.vmem_to_hbm [thread:$0]  %s828, 512, %s826, %s813, 256, 256, 16
        $region63: #{tpu_custom_call.1} parent=39 // pred_fallthru
          _
      $region40: #{tpu_custom_call.1} parent=5 // pred_fallthru
        _
      %p834 = scmp.le.s32.totalorder 2, %s18
      // Predicated region
      $region64: #{tpu_custom_call.1} parent=5 // pred_check
        %p835 = pneg %p834
      $region65: #{tpu_custom_call.1} parent=5 // pred_check_branch
        %837 = sbr.rel (%p835) target = $region67
      $region66: #{tpu_custom_call.1} parent=5 // pred_region
        %s838 = ssub.s32 %s18, 2
        // Predicated region
        $region68: #{tpu_custom_call.1} parent=66 // pred_check
          %p839 = pneg %p157
        $region69: #{tpu_custom_call.1} parent=66 // pred_check_branch
          %841 = sbr.rel (%p839) target = $region71
        $region70: #{tpu_custom_call.1} parent=66 // pred_region
          %s842 = sand.u32 %s142, 1
          %s843 = scalar_lea.sflag [#allocation4], %s842
          %s844 = sand.u32 %s142, 1
          %s845 = smul.addr %s844, 32
          %s846 = scalar_lea.vmem [#allocation8], %s845
          %847 = dma.done %s843, 512
        $region71: #{tpu_custom_call.1} parent=66 // pred_fallthru
          _
      $region67: #{tpu_custom_call.1} parent=5 // pred_fallthru
        _
    $region6: #{tpu_custom_call.1} parent=1 // loop_footer
      %s22 = sadd.s32 1, %s18
    $region7: #{tpu_custom_call.1} parent=1 // loop_footer_branch
      %17 = sbr.rel target = $region3
    $region8: #{tpu_custom_call.1} parent=1 // loop_exit
      _
    %848 = vsyncpa [#allocation3], 1
    %s849 = scalar_lea.sflag [#allocation3], 1
    %850 = vsyncpa %s849, 1
    %851 = vsyncpa [#allocation6], 1
    %852 = vsyncpa [#allocation4], 1
    %s853 = scalar_lea.sflag [#allocation4], 1
    %854 = vsyncpa %s853, 1

</llo_original>
